<compile_context>
chip_gen: v5e
topology: v5e:2x2
jax: 0.10.0
libtpu: 0.0.40
codegen_flags: <defaults>
</compile_context>

<pallas_src>
import jax
import jax.numpy as jnp
from jax.experimental import pallas as pl
from jax.experimental.pallas import tpu as pltpu

IN_FEATURES = 256
NEURONS = 256
OUT_FEATURES = 10
OUT_PAD = 128  # lane-dense padded output width (multiple of 128)


def _round_up(n, m):
    return (n + m - 1) // m * m


def _cdiv(a, b):
    return (a + b - 1) // b


def fcn_kernel(x_ref, wh_ref, bh_ref, w23_ref, b23_ref, out_ref):
    # Whole MLP hot path on VMEM tiles; weights are resident across all grid steps.
    cdt = wh_ref.dtype            # compute dtype for MXU operands (bf16 or f32)
    bh = bh_ref[...]              # (2, 256) f32 hidden-layer biases

    # Hidden layer 0 + ReLU (f32 MXU accumulation; bias add / ReLU ride the VPU slot)
    h = jnp.dot(x_ref[...], wh_ref[0], preferred_element_type=jnp.float32)
    h = jnp.maximum(h + bh[0:1, :], 0.0).astype(cdt)

    # Hidden layer 1 + ReLU
    h = jnp.dot(h, wh_ref[1], preferred_element_type=jnp.float32)
    h = jnp.maximum(h + bh[1:2, :], 0.0).astype(cdt)

    # Fused (Linear2 . Linear3): (TB, 256) @ (256, 128-padded) + b23  (no activation)
    out = jnp.dot(h, w23_ref[...], preferred_element_type=jnp.float32) + b23_ref[...]
    out_ref[...] = out.astype(out_ref.dtype)


def make_params(key):
    """Deterministic PyTorch-style Linear init: U(-1/sqrt(fan_in), 1/sqrt(fan_in)).
    Weights stored (in, out) so the kernel computes x @ W + b (== PyTorch x @ W.T + b)."""
    dims = [(IN_FEATURES, NEURONS), (NEURONS, NEURONS),
            (NEURONS, NEURONS), (NEURONS, OUT_FEATURES)]
    params = []
    for fan_in, fan_out in dims:
        key, kw, kb = jax.random.split(key, 3)
        bound = 1.0 / (fan_in ** 0.5)
        w = jax.random.uniform(kw, (fan_in, fan_out), jnp.float32, -bound, bound)
        b = jax.random.uniform(kb, (1, fan_out), jnp.float32, -bound, bound)
        params.append((w, b))
    return params


def prepare_kernel_params(params, compute_dtype):
    """One-time parameter prep: fuse Linear2+Linear3 (exact, no activation between),
    pad output lanes to 128 with zero columns, stack the two hidden layers."""
    (w0, b0), (w1, b1), (w2, b2), (w3, b3) = params

    w23 = w2 @ w3                     # (256, 10), exact fusion in f32
    b23 = b2 @ w3 + b3                # (1, 10)

    # Lane-dense padding of the output projection; zero columns leave results unchanged.
    w23 = jnp.pad(w23, ((0, 0), (0, OUT_PAD - OUT_FEATURES)))
    b23 = jnp.pad(b23, ((0, 0), (0, OUT_PAD - OUT_FEATURES)))

    wh = jnp.stack([w0, w1]).astype(compute_dtype)               # (2, 256, 256)
    bh = jnp.concatenate([b0, b1], axis=0).astype(jnp.float32)   # (2, 256) biases stay f32
    return wh, bh, w23.astype(compute_dtype), b23.astype(jnp.float32)


def searchable_fcn(x_nchw, params, compute_dtype=jnp.bfloat16,
                   out_dtype=jnp.float32, target_batch_tile=2048):
    """Forward pass of SearchableFCN.  bf16 operands / f32 accumulation by default;
    pass compute_dtype=jnp.float32 for exact-PyTorch numerics, out_dtype=jnp.bfloat16
    to halve output writeback on the HBM-bound v6e path."""
    B = x_nchw.shape[0]
    x = x_nchw.reshape(B, -1).astype(compute_dtype)   # matches x.view(B, -1)
    assert x.shape[1] == IN_FEATURES

    wh, bh, w23, b23 = prepare_kernel_params(params, compute_dtype)

    # --- batch tiling --------------------------------------------------------
    # Tile count first (avoids round_up(B, TB) padding waste), then TB = cdiv(B, tiles)
    # rounded to the sublane granule.  Force >=2 tiles when B is large enough so the
    # "parallel" batch axis can be sharded across v7x's two TensorCores.
    num_tiles = _cdiv(B, target_batch_tile)
    if num_tiles == 1 and B >= 256:
        num_tiles = 2
    sub = 16 if jnp.dtype(compute_dtype).itemsize < 4 else 8
    TB = _round_up(_cdiv(B, num_tiles), sub)
    B_pad = num_tiles * TB
    if B_pad != B:
        x = jnp.pad(x, ((0, B_pad - B), (0, 0)))
    grid = (num_tiles,)

    dsize = jnp.dtype(compute_dtype).itemsize
    osize = jnp.dtype(out_dtype).itemsize
    weight_bytes = ((2 * NEURONS * NEURONS + NEURONS * OUT_PAD) * dsize
                    + (2 * NEURONS + OUT_PAD) * 4)

    # VMEM budget: double-buffered x/out tiles + (double-counted, to be safe) resident
    # weights + slack.  Capped well below v7x's 64 MiB physical VMEM.
    vmem_need = (2 * (TB * IN_FEATURES * dsize + TB * OUT_PAD * osize)
                 + 2 * weight_bytes + (2 << 20))
    vmem_limit = int(min(max(vmem_need, 16 << 20), 48 << 20))

    cost = pl.CostEstimate(
        flops=2 * B_pad * (2 * NEURONS * NEURONS + NEURONS * OUT_PAD),
        transcendentals=0,
        bytes_accessed=(B_pad * IN_FEATURES * dsize
                        + weight_bytes
                        + B_pad * OUT_PAD * osize),
    )

    out = pl.pallas_call(
        fcn_kernel,
        out_shape=jax.ShapeDtypeStruct((B_pad, OUT_PAD), out_dtype),
        grid=grid,
        in_specs=[
            pl.BlockSpec((TB, IN_FEATURES), lambda i: (i, 0)),   # x: tiled over batch
            pl.BlockSpec(wh.shape, lambda i: (0, 0, 0)),         # hidden weights: resident
            pl.BlockSpec(bh.shape, lambda i: (0, 0)),            # hidden biases: resident
            pl.BlockSpec(w23.shape, lambda i: (0, 0)),           # fused out weight: resident
            pl.BlockSpec(b23.shape, lambda i: (0, 0)),           # fused out bias: resident
        ],
        out_specs=pl.BlockSpec((TB, OUT_PAD), lambda i: (i, 0)),
        compiler_params=pltpu.CompilerParams(
            dimension_semantics=("parallel",),
            vmem_limit_bytes=vmem_limit),
        cost_estimate=cost,
    )(x, wh, bh, w23, b23)

    # Padded rows/columns hold bias-driven garbage; slice them away before any consumer.
    return out[:B, :OUT_FEATURES]


def reference_fcn(x_nchw, params):
    """Pure-JAX f32 reference matching the PyTorch module exactly (no fusion)."""
    x = x_nchw.reshape(x_nchw.shape[0], -1).astype(jnp.float32)
    (w0, b0), (w1, b1), (w2, b2), (w3, b3) = params
    h = jnp.maximum(x @ w0 + b0, 0.0)
    h = jnp.maximum(h @ w1 + b1, 0.0)
    h = h @ w2 + b2
    return h @ w3 + b3


if __name__ == "__main__":
    key = jax.random.PRNGKey(0)
    key, kx = jax.random.split(key)

    # Deterministic small input: NCHW (B=8, C=1, H=16, W=16) -> flattens to 256 features.
    x = jax.random.normal(kx, (8, 1, 16, 16), jnp.float32)
    params = make_params(key)

    ref = reference_fcn(x, params)

    # Default bf16 fast path (MXU-native on v5e/v6e/v7x); f32 accumulation/output,
    # looser tolerance since x/weights (incl. the fused W2@W3) are bf16.
    out_bf16 = jax.block_until_ready(searchable_fcn(x, params))
    assert out_bf16.shape == (8, 10)
    assert jnp.allclose(out_bf16, ref, atol=5e-2, rtol=5e-2), "bf16 Pallas output mismatch"

    # f32 path (matches PyTorch numerics; L2/L3 fusion exact up to f32 rounding).
    out_f32 = jax.block_until_ready(
        searchable_fcn(x, params, compute_dtype=jnp.float32))
    assert out_f32.shape == (8, 10)
    assert jnp.allclose(out_f32, ref, atol=1e-4, rtol=1e-4), "f32 Pallas output mismatch"

    print("KERNEL_OK")
</pallas_src>

<mosaic_0001>
module attributes {stable_mosaic.version = 11 : i64} {
  func.func @fcn_kernel(%arg0: i32, %arg1: memref<16x256xbf16, #tpu.memory_space<vmem>>, %arg2: memref<2x256x256xbf16, #tpu.memory_space<vmem>>, %arg3: memref<2x256xf32, #tpu.memory_space<vmem>>, %arg4: memref<256x128xbf16, #tpu.memory_space<vmem>>, %arg5: memref<1x128xf32, #tpu.memory_space<vmem>>, %arg6: memref<16x128xf32, #tpu.memory_space<vmem>>) attributes {dimension_semantics = [#tpu.dimension_semantics<parallel>], iteration_bounds = array<i64: 1>, scalar_prefetch = 0 : i64, scratch_operands = 0 : i64, tpu.core_type = #tpu.core_type<tc>, window_params = [{transform_indices = @transform_0, window_bounds = array<i64: 16, 256>}, {pipeline_mode = #tpu.pipeline_mode<synchronous>, transform_indices = @transform_1, window_bounds = array<i64: 2, 256, 256>}, {pipeline_mode = #tpu.pipeline_mode<synchronous>, transform_indices = @transform_2, window_bounds = array<i64: 2, 256>}, {pipeline_mode = #tpu.pipeline_mode<synchronous>, transform_indices = @transform_3, window_bounds = array<i64: 256, 128>}, {pipeline_mode = #tpu.pipeline_mode<synchronous>, transform_indices = @transform_4, window_bounds = array<i64: 1, 128>}, {transform_indices = @transform_5, window_bounds = array<i64: 16, 128>}]} {
    %c0 = arith.constant 0 : index
    %c0_0 = arith.constant 0 : index
    %0 = vector.load %arg3[%c0, %c0_0] : memref<2x256xf32, #tpu.memory_space<vmem>>, vector<2x256xf32>
    %c0_1 = arith.constant 0 : index
    %c0_2 = arith.constant 0 : index
    %1 = vector.load %arg1[%c0_1, %c0_2] : memref<16x256xbf16, #tpu.memory_space<vmem>>, vector<16x256xbf16>
    %c0_3 = arith.constant 0 : index
    %c0_4 = arith.constant 0 : index
    %c0_5 = arith.constant 0 : index
    %2 = vector.load %arg2[%c0_3, %c0_4, %c0_5] : memref<2x256x256xbf16, #tpu.memory_space<vmem>>, vector<1x256x256xbf16>
    %3 = vector.shape_cast %2 : vector<1x256x256xbf16> to vector<256x256xbf16>
    %cst = arith.constant dense<0.000000e+00> : vector<16x256xf32>
    %4 = tpu.matmul %1, %3, %cst {dimension_numbers = #tpu.dot_dimension_numbers<[1], [0], [0], [1], [0, 0, 1, 1], [], []>} : vector<16x256xbf16>, vector<256x256xbf16>, vector<16x256xf32> -> vector<16x256xf32>
    %5 = vector.extract_strided_slice %0 {offsets = [0, 0], sizes = [1, 256], strides = [1, 1]} : vector<2x256xf32> to vector<1x256xf32>
    %6 = vector.broadcast %5 : vector<1x256xf32> to vector<16x256xf32>
    %7 = arith.addf %4, %6 : vector<16x256xf32>
    %cst_6 = arith.constant 0.000000e+00 : f32
    %8 = vector.broadcast %cst_6 : f32 to vector<16x256xf32>
    %9 = arith.maximumf %7, %8 : vector<16x256xf32>
    %10 = arith.truncf %9 : vector<16x256xf32> to vector<16x256xbf16>
    %c1 = arith.constant 1 : index
    %c0_7 = arith.constant 0 : index
    %c0_8 = arith.constant 0 : index
    %11 = vector.load %arg2[%c1, %c0_7, %c0_8] : memref<2x256x256xbf16, #tpu.memory_space<vmem>>, vector<1x256x256xbf16>
    %12 = vector.shape_cast %11 : vector<1x256x256xbf16> to vector<256x256xbf16>
    %cst_9 = arith.constant dense<0.000000e+00> : vector<16x256xf32>
    %13 = tpu.matmul %10, %12, %cst_9 {dimension_numbers = #tpu.dot_dimension_numbers<[1], [0], [0], [1], [0, 0, 1, 1], [], []>} : vector<16x256xbf16>, vector<256x256xbf16>, vector<16x256xf32> -> vector<16x256xf32>
    %14 = vector.extract_strided_slice %0 {offsets = [1, 0], sizes = [1, 256], strides = [1, 1]} : vector<2x256xf32> to vector<1x256xf32>
    %15 = vector.broadcast %14 : vector<1x256xf32> to vector<16x256xf32>
    %16 = arith.addf %13, %15 : vector<16x256xf32>
    %cst_10 = arith.constant 0.000000e+00 : f32
    %17 = vector.broadcast %cst_10 : f32 to vector<16x256xf32>
    %18 = arith.maximumf %16, %17 : vector<16x256xf32>
    %19 = arith.truncf %18 : vector<16x256xf32> to vector<16x256xbf16>
    %c0_11 = arith.constant 0 : index
    %c0_12 = arith.constant 0 : index
    %20 = vector.load %arg4[%c0_11, %c0_12] : memref<256x128xbf16, #tpu.memory_space<vmem>>, vector<256x128xbf16>
    %cst_13 = arith.constant dense<0.000000e+00> : vector<16x128xf32>
    %21 = tpu.matmul %19, %20, %cst_13 {dimension_numbers = #tpu.dot_dimension_numbers<[1], [0], [0], [1], [0, 0, 1, 1], [], []>} : vector<16x256xbf16>, vector<256x128xbf16>, vector<16x128xf32> -> vector<16x128xf32>
    %c0_14 = arith.constant 0 : index
    %c0_15 = arith.constant 0 : index
    %22 = vector.load %arg5[%c0_14, %c0_15] : memref<1x128xf32, #tpu.memory_space<vmem>>, vector<1x128xf32>
    %23 = vector.broadcast %22 : vector<1x128xf32> to vector<16x128xf32>
    %24 = arith.addf %21, %23 : vector<16x128xf32>
    %c0_16 = arith.constant 0 : index
    %c0_17 = arith.constant 0 : index
    %25 = vector.load %arg6[%c0_16, %c0_17] : memref<16x128xf32, #tpu.memory_space<vmem>>, vector<16x128xf32>
    tpu.vector_store %arg6[%c0_16, %c0_17], %24 {strides = array<i32>} : memref<16x128xf32, #tpu.memory_space<vmem>>, vector<16x128xf32>,
    return
  }
  func.func @transform_0(%arg0: i32) -> (i32, i32) {
    %c0_i32 = arith.constant 0 : i32
    %c0_i32_0 = arith.constant 0 : i32
    return %arg0, %c0_i32 : i32, i32
  }
  func.func @transform_1(%arg0: i32) -> (i32, i32, i32) {
    %c0_i32 = arith.constant 0 : i32
    %c0_i32_0 = arith.constant 0 : i32
    %c0_i32_1 = arith.constant 0 : i32
    %c0_i32_2 = arith.constant 0 : i32
    return %c0_i32, %c0_i32_0, %c0_i32_1 : i32, i32, i32
  }
  func.func @transform_2(%arg0: i32) -> (i32, i32) {
    %c0_i32 = arith.constant 0 : i32
    %c0_i32_0 = arith.constant 0 : i32
    %c0_i32_1 = arith.constant 0 : i32
    return %c0_i32, %c0_i32_0 : i32, i32
  }
  func.func @transform_3(%arg0: i32) -> (i32, i32) {
    %c0_i32 = arith.constant 0 : i32
    %c0_i32_0 = arith.constant 0 : i32
    %c0_i32_1 = arith.constant 0 : i32
    return %c0_i32, %c0_i32_0 : i32, i32
  }
  func.func @transform_4(%arg0: i32) -> (i32, i32) {
    %c0_i32 = arith.constant 0 : i32
    %c0_i32_0 = arith.constant 0 : i32
    %c0_i32_1 = arith.constant 0 : i32
    return %c0_i32, %c0_i32_0 : i32, i32
  }
  func.func @transform_5(%arg0: i32) -> (i32, i32) {
    %c0_i32 = arith.constant 0 : i32
    %c0_i32_0 = arith.constant 0 : i32
    return %arg0, %c0_i32 : i32, i32
  }
}

</mosaic_0001>

<llo_original>
// kernel: tpu_custom_call.1
$region0: #{tpu_custom_call.1}
  #allocation0 [shape = 'u32[]', space=smem, size = 0x4, offset = 0x4, fixed_abs, tag = 'smem constant byte address 0x4 - core index']
  #allocation1 [shape = 'u32[72,128]{1,0:T(1,128)}', space=vmem, size = 0x9000, scoped, tag = 'internal scratch']
  %s0 = inlined_call_operand.hbm [shape: bf16[16,256], index: 0, kind: input, shape index: {}]
  %s1 = inlined_call_operand.hbm [shape: bf16[2,256,256], index: 1, kind: input, shape index: {}]
  %s2 = inlined_call_operand.hbm [shape: f32[2,256], index: 2, kind: input, shape index: {}]
  %s3 = inlined_call_operand.hbm [shape: bf16[256,128], index: 3, kind: input, shape index: {}]
  %s4 = inlined_call_operand.vmem [shape: f32[1,128], index: 4, kind: input, shape index: {}]
  %s5 = inlined_call_operand.hbm [shape: f32[16,128], index: 5, kind: output, shape index: {}]
  %s6 = sld [smem:[#allocation0]]
  $region46: #{tpu_custom_call.1} parent=0
    _
  %s8 = ssub.s32 1, %s6
  %s9 = scalar_select 0, %s8, %s6
  $region1: #{tpu_custom_call.1} parent=0
    #allocation2 [shape = 'u8[8192]{0}', space=vmem, size = 0x2000, scoped, tag = 'input window, operand 0, single buffered']
    #allocation3 [shape = 's32[1]{0}', space=sflag, size = 0x4, scoped, tag = 'scoped memory for tpu_custom_call.1']
    #allocation4 [shape = 's32[1]{0}', space=sflag, size = 0x4, scoped, tag = 'scoped memory for tpu_custom_call.1']
    #allocation5 [shape = 'u8[262144]{0}', space=vmem, size = 0x40000, scoped, tag = 'input window, operand 1, single buffered']
    #allocation6 [shape = 's32[1]{0}', space=sflag, size = 0x4, scoped, tag = 'scoped memory for tpu_custom_call.1']
    #allocation7 [shape = 'u8[2048]{0}', space=vmem, size = 0x800, scoped, tag = 'input window, operand 2, single buffered']
    #allocation8 [shape = 'u8[65536]{0}', space=vmem, size = 0x10000, scoped, tag = 'input window, operand 3, single buffered']
    #allocation9 [shape = 's32[1]{0}', space=sflag, size = 0x4, scoped, tag = 'scoped memory for tpu_custom_call.1']
    #allocation10 [shape = 'u8[8192]{0}', space=vmem, size = 0x2000, scoped, tag = 'output window, operand 0, single buffered']
    %10 = vsyncpa [#allocation3], 0
    %11 = vsyncpa [#allocation6], 0
    %12 = vsyncpa [#allocation9], 0
    %13 = vsyncpa [#allocation4], 0
    // Predicated region
    $region2: #{tpu_custom_call.1} parent=1 // pred_check
      _
    $region3: #{tpu_custom_call.1} parent=1 // pred_check_branch
      %15 = sbr.rel (0) target = $region5
    $region4: #{tpu_custom_call.1} parent=1 // pred_region
      %17 = vsyncadd [#allocation3], 0
      %s18 = sshll.u32 %s0, 4
      %s19 = int_to_ptr.hbm [resolvable:$true] %s18
      %s20 = sshll.u32 [#allocation2], 4
      %s21 = int_to_ptr.vmem [resolvable:$true] %s20
      %26 = dma.hbm_to_vmem [thread:$0]  %s19, 256, %s21, [#allocation3], 128, 128, 8
    $region5: #{tpu_custom_call.1} parent=1 // pred_fallthru
      _
    // Predicated region
    $region6: #{tpu_custom_call.1} parent=1 // pred_check
      _
    $region7: #{tpu_custom_call.1} parent=1 // pred_check_branch
      %28 = sbr.rel (0) target = $region9
    $region8: #{tpu_custom_call.1} parent=1 // pred_region
      %30 = vsyncadd [#allocation6], 0
      %s31 = sshll.u32 %s1, 4
      %s32 = int_to_ptr.hbm [resolvable:$true] %s31
      %s33 = sshll.u32 [#allocation5], 4
      %s34 = int_to_ptr.vmem [resolvable:$true] %s33
      %39 = dma.hbm_to_vmem [thread:$0]  %s32, 8192, %s34, [#allocation6], 128, 128, 8
    $region9: #{tpu_custom_call.1} parent=1 // pred_fallthru
      _
    // Predicated region
    $region10: #{tpu_custom_call.1} parent=1 // pred_check
      _
    $region11: #{tpu_custom_call.1} parent=1 // pred_check_branch
      %41 = sbr.rel (0) target = $region13
    $region12: #{tpu_custom_call.1} parent=1 // pred_region
      %43 = vsyncadd [#allocation6], 0
      %s45 = sshll.u32 %s2, 4
      %s46 = int_to_ptr.hbm [resolvable:$true] %s45
      %s47 = sshll.u32 [#allocation7], 4
      %s48 = int_to_ptr.vmem [resolvable:$true] %s47
      %50 = dma.hbm_to_vmem [thread:$0]  %s46, 64, %s48, [#allocation6]
    $region13: #{tpu_custom_call.1} parent=1 // pred_fallthru
      _
    // Predicated region
    $region14: #{tpu_custom_call.1} parent=1 // pred_check
      _
    $region15: #{tpu_custom_call.1} parent=1 // pred_check_branch
      %52 = sbr.rel (0) target = $region17
    $region16: #{tpu_custom_call.1} parent=1 // pred_region
      %54 = vsyncadd [#allocation9], 0
      %s55 = sshll.u32 %s3, 4
      %s56 = int_to_ptr.hbm [resolvable:$true] %s55
      %s57 = sshll.u32 [#allocation8], 4
      %s58 = int_to_ptr.vmem [resolvable:$true] %s57
      %63 = dma.hbm_to_vmem [thread:$0]  %s56, 2048, %s58, [#allocation9], 64, 64, 4
    $region17: #{tpu_custom_call.1} parent=1 // pred_fallthru
      _
    // Predicated region
    $region18: #{tpu_custom_call.1} parent=1 // pred_check
      _
    $region19: #{tpu_custom_call.1} parent=1 // pred_check_branch
      %65 = sbr.rel (0) target = $region21
    $region20: #{tpu_custom_call.1} parent=1 // pred_region
      _
    $region21: #{tpu_custom_call.1} parent=1 // pred_fallthru
      _
    // Predicated region
    $region22: #{tpu_custom_call.1} parent=1 // pred_check
      _
    $region23: #{tpu_custom_call.1} parent=1 // pred_check_branch
      %67 = sbr.rel (0) target = $region25
    $region24: #{tpu_custom_call.1} parent=1 // pred_region
      %69 = dma.done [#allocation3], 256
    $region25: #{tpu_custom_call.1} parent=1 // pred_fallthru
      _
    // Predicated region
    $region26: #{tpu_custom_call.1} parent=1 // pred_check
      _
    $region27: #{tpu_custom_call.1} parent=1 // pred_check_branch
      %71 = sbr.rel (0) target = $region29
    $region28: #{tpu_custom_call.1} parent=1 // pred_region
      %73 = dma.done [#allocation6], 8192
    $region29: #{tpu_custom_call.1} parent=1 // pred_fallthru
      _
    // Predicated region
    $region30: #{tpu_custom_call.1} parent=1 // pred_check
      _
    $region31: #{tpu_custom_call.1} parent=1 // pred_check_branch
      %75 = sbr.rel (0) target = $region33
    $region32: #{tpu_custom_call.1} parent=1 // pred_region
      %77 = dma.done [#allocation6], 64
    $region33: #{tpu_custom_call.1} parent=1 // pred_fallthru
      _
    // Predicated region
    $region34: #{tpu_custom_call.1} parent=1 // pred_check
      _
    $region35: #{tpu_custom_call.1} parent=1 // pred_check_branch
      %79 = sbr.rel (0) target = $region37
    $region36: #{tpu_custom_call.1} parent=1 // pred_region
      %81 = dma.done [#allocation9], 2048
    $region37: #{tpu_custom_call.1} parent=1 // pred_fallthru
      _
    %v82 = vld [vmem:[#allocation7] sm:$0xf]
    %v83 = vld [vmem:[#allocation2] sm:$0xff]
    %v84 = vld [vmem:[#allocation2 + $0x8] sm:$0xff]
    %v85 = vld [vmem:[#allocation5] sm:$0xff]
    %v86 = vld [vmem:[#allocation5 + $0x8] sm:$0xff]
    %v87 = vld [vmem:[#allocation5 + $0x10] sm:$0xff]
    %v88 = vld [vmem:[#allocation5 + $0x18] sm:$0xff]
    %v89 = vld [vmem:[#allocation5 + $0x20] sm:$0xff]
    %v90 = vld [vmem:[#allocation5 + $0x28] sm:$0xff]
    %v91 = vld [vmem:[#allocation5 + $0x30] sm:$0xff]
    %v92 = vld [vmem:[#allocation5 + $0x38] sm:$0xff]
    %v93 = vld [vmem:[#allocation5 + $0x40] sm:$0xff]
    %v94 = vld [vmem:[#allocation5 + $0x48] sm:$0xff]
    %v95 = vld [vmem:[#allocation5 + $0x50] sm:$0xff]
    %v96 = vld [vmem:[#allocation5 + $0x58] sm:$0xff]
    %v97 = vld [vmem:[#allocation5 + $0x60] sm:$0xff]
    %v98 = vld [vmem:[#allocation5 + $0x68] sm:$0xff]
    %v99 = vld [vmem:[#allocation5 + $0x70] sm:$0xff]
    %v100 = vld [vmem:[#allocation5 + $0x78] sm:$0xff]
    %v101 = vld [vmem:[#allocation5 + $0x80] sm:$0xff]
    %v102 = vld [vmem:[#allocation5 + $0x88] sm:$0xff]
    %v103 = vld [vmem:[#allocation5 + $0x90] sm:$0xff]
    %v104 = vld [vmem:[#allocation5 + $0x98] sm:$0xff]
    %v105 = vld [vmem:[#allocation5 + $0xa0] sm:$0xff]
    %v106 = vld [vmem:[#allocation5 + $0xa8] sm:$0xff]
    %v107 = vld [vmem:[#allocation5 + $0xb0] sm:$0xff]
    %v108 = vld [vmem:[#allocation5 + $0xb8] sm:$0xff]
    %v109 = vld [vmem:[#allocation5 + $0xc0] sm:$0xff]
    %v110 = vld [vmem:[#allocation5 + $0xc8] sm:$0xff]
    %v111 = vld [vmem:[#allocation5 + $0xd0] sm:$0xff]
    %v112 = vld [vmem:[#allocation5 + $0xd8] sm:$0xff]
    %v113 = vld [vmem:[#allocation5 + $0xe0] sm:$0xff]
    %v114 = vld [vmem:[#allocation5 + $0xe8] sm:$0xff]
    %v115 = vld [vmem:[#allocation5 + $0xf0] sm:$0xff]
    %v116 = vld [vmem:[#allocation5 + $0xf8] sm:$0xff]
    %v118 = vperm.slane %v82, 0
    %v119 = vperm.slane %v82, 2
    %v122 = vperm.slane %v118, 0
    %v123 = vperm.slane %v119, 0
    %v126 = vunpack.c.l.b16 %v83
    %v127 = vunpack.c.h.b16 %v83
    %v128 = vunpack.c.l.b16 %v84
    %v129 = vunpack.c.h.b16 %v84
    %v130 = vpack.c.b16 %v128, %v126
    %v131 = vpack.c.b16 %v129, %v127
    %v166 = vunpack.c.l.b16 %v85
    %v167 = vunpack.c.h.b16 %v85
    %v168 = vunpack.c.l.b16 %v86
    %v169 = vunpack.c.h.b16 %v86
    %v170 = vunpack.c.l.b16 %v87
    %v171 = vunpack.c.h.b16 %v87
    %v172 = vunpack.c.l.b16 %v88
    %v173 = vunpack.c.h.b16 %v88
    %v174 = vunpack.c.l.b16 %v89
    %v175 = vunpack.c.h.b16 %v89
    %v176 = vunpack.c.l.b16 %v90
    %v177 = vunpack.c.h.b16 %v90
    %v178 = vunpack.c.l.b16 %v91
    %v179 = vunpack.c.h.b16 %v91
    %v180 = vunpack.c.l.b16 %v92
    %v181 = vunpack.c.h.b16 %v92
    %v182 = vunpack.c.l.b16 %v93
    %v183 = vunpack.c.h.b16 %v93
    %v184 = vunpack.c.l.b16 %v94
    %v185 = vunpack.c.h.b16 %v94
    %v186 = vunpack.c.l.b16 %v95
    %v187 = vunpack.c.h.b16 %v95
    %v188 = vunpack.c.l.b16 %v96
    %v189 = vunpack.c.h.b16 %v96
    %v190 = vunpack.c.l.b16 %v97
    %v191 = vunpack.c.h.b16 %v97
    %v192 = vunpack.c.l.b16 %v98
    %v193 = vunpack.c.h.b16 %v98
    %v194 = vunpack.c.l.b16 %v99
    %v195 = vunpack.c.h.b16 %v99
    %v196 = vunpack.c.l.b16 %v100
    %v197 = vunpack.c.h.b16 %v100
    %v198 = vunpack.c.l.b16 %v101
    %v199 = vunpack.c.h.b16 %v101
    %v200 = vunpack.c.l.b16 %v102
    %v201 = vunpack.c.h.b16 %v102
    %v202 = vunpack.c.l.b16 %v103
    %v203 = vunpack.c.h.b16 %v103
    %v204 = vunpack.c.l.b16 %v104
    %v205 = vunpack.c.h.b16 %v104
    %v206 = vunpack.c.l.b16 %v105
    %v207 = vunpack.c.h.b16 %v105
    %v208 = vunpack.c.l.b16 %v106
    %v209 = vunpack.c.h.b16 %v106
    %v210 = vunpack.c.l.b16 %v107
    %v211 = vunpack.c.h.b16 %v107
    %v212 = vunpack.c.l.b16 %v108
    %v213 = vunpack.c.h.b16 %v108
    %v214 = vunpack.c.l.b16 %v109
    %v215 = vunpack.c.h.b16 %v109
    %v216 = vunpack.c.l.b16 %v110
    %v217 = vunpack.c.h.b16 %v110
    %v218 = vunpack.c.l.b16 %v111
    %v219 = vunpack.c.h.b16 %v111
    %v220 = vunpack.c.l.b16 %v112
    %v221 = vunpack.c.h.b16 %v112
    %v222 = vunpack.c.l.b16 %v113
    %v223 = vunpack.c.h.b16 %v113
    %v224 = vunpack.c.l.b16 %v114
    %v225 = vunpack.c.h.b16 %v114
    %v226 = vunpack.c.l.b16 %v115
    %v227 = vunpack.c.h.b16 %v115
    %v228 = vunpack.c.l.b16 %v116
    %v229 = vunpack.c.h.b16 %v116
    %v230 = vpack.c.b16 %v168, %v166
    %v231 = vpack.c.b16 %v169, %v167
    %v232 = vpack.c.b16 %v172, %v170
    %v233 = vpack.c.b16 %v173, %v171
    %v234 = vpack.c.b16 %v176, %v174
    %v235 = vpack.c.b16 %v177, %v175
    %v236 = vpack.c.b16 %v180, %v178
    %v237 = vpack.c.b16 %v181, %v179
    %v238 = vpack.c.b16 %v184, %v182
    %v239 = vpack.c.b16 %v185, %v183
    %v240 = vpack.c.b16 %v188, %v186
    %v241 = vpack.c.b16 %v189, %v187
    %v242 = vpack.c.b16 %v192, %v190
    %v243 = vpack.c.b16 %v193, %v191
    %v244 = vpack.c.b16 %v196, %v194
    %v245 = vpack.c.b16 %v197, %v195
    %v246 = vpack.c.b16 %v200, %v198
    %v247 = vpack.c.b16 %v201, %v199
    %v248 = vpack.c.b16 %v204, %v202
    %v249 = vpack.c.b16 %v205, %v203
    %v250 = vpack.c.b16 %v208, %v206
    %v251 = vpack.c.b16 %v209, %v207
    %v252 = vpack.c.b16 %v212, %v210
    %v253 = vpack.c.b16 %v213, %v211
    %v254 = vpack.c.b16 %v216, %v214
    %v255 = vpack.c.b16 %v217, %v215
    %v256 = vpack.c.b16 %v220, %v218
    %v257 = vpack.c.b16 %v221, %v219
    %v258 = vpack.c.b16 %v224, %v222
    %v259 = vpack.c.b16 %v225, %v223
    %v260 = vpack.c.b16 %v228, %v226
    %v261 = vpack.c.b16 %v229, %v227
    %294 = vmatpush.bf16.msra.mxu0 %v244
    %295 = vmatpush.bf16.msra.mxu0 %v242
    %296 = vmatpush.bf16.msra.mxu0 %v240
    %297 = vmatpush.bf16.msra.mxu0 %v238
    %298 = vmatpush.bf16.msra.mxu0 %v236
    %299 = vmatpush.bf16.msra.mxu0 %v234
    %300 = vmatpush.bf16.msra.mxu0 %v232
    %301 = vmatpush.bf16.msra.mxu0 %v230
    %302 = vmatmul.bf16.gmra.mxu0 %v130
    %v303 = vpop.f32.mrf.mxu0
    %v304 = vadd.f32 %v122, %v303
    %v305 = vpop.f32.mrf.mxu0
    %v306 = vadd.f32 %v122, %v305
    %307 = vdwg.mxu0
    %308 = vmatpush.bf16.msra.mxu0 %v260
    %309 = vmatpush.bf16.msra.mxu0 %v258
    %310 = vmatpush.bf16.msra.mxu0 %v256
    %311 = vmatpush.bf16.msra.mxu0 %v254
    %312 = vmatpush.bf16.msra.mxu0 %v252
    %313 = vmatpush.bf16.msra.mxu0 %v250
    %314 = vmatpush.bf16.msra.mxu0 %v248
    %315 = vmatpush.bf16.msra.mxu0 %v246
    %316 = vmatmul.bf16.gmra.mxu0 %v131
    %v317 = vpop.f32.mrf.mxu0
    %v318 = vadd.f32 %v304, %v317
    %v319 = vpop.f32.mrf.mxu0
    %v320 = vadd.f32 %v306, %v319
    %321 = vdwg.mxu0
    %322 = vmatpush.bf16.msra.mxu0 %v245
    %323 = vmatpush.bf16.msra.mxu0 %v243
    %324 = vmatpush.bf16.msra.mxu0 %v241
    %325 = vmatpush.bf16.msra.mxu0 %v239
    %326 = vmatpush.bf16.msra.mxu0 %v237
    %327 = vmatpush.bf16.msra.mxu0 %v235
    %328 = vmatpush.bf16.msra.mxu0 %v233
    %329 = vmatpush.bf16.msra.mxu0 %v231
    %330 = vmatmul.bf16.gmra.mxu0 %v130
    %v331 = vpop.f32.mrf.mxu0
    %v332 = vadd.f32 %v123, %v331
    %v333 = vpop.f32.mrf.mxu0
    %v334 = vadd.f32 %v123, %v333
    %335 = vdwg.mxu0
    %336 = vmatpush.bf16.msra.mxu0 %v261
    %337 = vmatpush.bf16.msra.mxu0 %v259
    %338 = vmatpush.bf16.msra.mxu0 %v257
    %339 = vmatpush.bf16.msra.mxu0 %v255
    %340 = vmatpush.bf16.msra.mxu0 %v253
    %341 = vmatpush.bf16.msra.mxu0 %v251
    %342 = vmatpush.bf16.msra.mxu0 %v249
    %343 = vmatpush.bf16.msra.mxu0 %v247
    %344 = vmatmul.bf16.gmra.mxu0 %v131
    %v345 = vpop.f32.mrf.mxu0
    %v346 = vadd.f32 %v332, %v345
    %v347 = vpop.f32.mrf.mxu0
    %v348 = vadd.f32 %v334, %v347
    %349 = vdwg.mxu0
    %v350 = vmax.f32 %v318, 0.0
    %v351 = vmax.f32 %v346, 0.0
    %v352 = vmax.f32 %v320, 0.0
    %v353 = vmax.f32 %v348, 0.0
    %v354 = vpack.c.bf16 %v352, %v350
    %v355 = vpack.c.bf16 %v353, %v351
    %s356 = scalar_lea.vmem [#allocation5], 256
    %v357 = vld [vmem:[%s356] sm:$0xff]
    %v358 = vld [vmem:[%s356 + $0x8] sm:$0xff]
    %v359 = vld [vmem:[%s356 + $0x10] sm:$0xff]
    %v360 = vld [vmem:[%s356 + $0x18] sm:$0xff]
    %v361 = vld [vmem:[%s356 + $0x20] sm:$0xff]
    %v362 = vld [vmem:[%s356 + $0x28] sm:$0xff]
    %v363 = vld [vmem:[%s356 + $0x30] sm:$0xff]
    %v364 = vld [vmem:[%s356 + $0x38] sm:$0xff]
    %v365 = vld [vmem:[%s356 + $0x40] sm:$0xff]
    %v366 = vld [vmem:[%s356 + $0x48] sm:$0xff]
    %v367 = vld [vmem:[%s356 + $0x50] sm:$0xff]
    %v368 = vld [vmem:[%s356 + $0x58] sm:$0xff]
    %v369 = vld [vmem:[%s356 + $0x60] sm:$0xff]
    %v370 = vld [vmem:[%s356 + $0x68] sm:$0xff]
    %v371 = vld [vmem:[%s356 + $0x70] sm:$0xff]
    %v372 = vld [vmem:[%s356 + $0x78] sm:$0xff]
    %v373 = vld [vmem:[%s356 + $0x80] sm:$0xff]
    %v374 = vld [vmem:[%s356 + $0x88] sm:$0xff]
    %v375 = vld [vmem:[%s356 + $0x90] sm:$0xff]
    %v376 = vld [vmem:[%s356 + $0x98] sm:$0xff]
    %v377 = vld [vmem:[%s356 + $0xa0] sm:$0xff]
    %v378 = vld [vmem:[%s356 + $0xa8] sm:$0xff]
    %v379 = vld [vmem:[%s356 + $0xb0] sm:$0xff]
    %v380 = vld [vmem:[%s356 + $0xb8] sm:$0xff]
    %v381 = vld [vmem:[%s356 + $0xc0] sm:$0xff]
    %v382 = vld [vmem:[%s356 + $0xc8] sm:$0xff]
    %v383 = vld [vmem:[%s356 + $0xd0] sm:$0xff]
    %v384 = vld [vmem:[%s356 + $0xd8] sm:$0xff]
    %v385 = vld [vmem:[%s356 + $0xe0] sm:$0xff]
    %v386 = vld [vmem:[%s356 + $0xe8] sm:$0xff]
    %v387 = vld [vmem:[%s356 + $0xf0] sm:$0xff]
    %v388 = vld [vmem:[%s356 + $0xf8] sm:$0xff]
    %v389 = vperm.slane %v82, 1
    %v390 = vperm.slane %v82, 3
    %v393 = vperm.slane %v389, 1
    %v394 = vperm.slane %v390, 1
    %v427 = vunpack.c.l.b16 %v357
    %v428 = vunpack.c.h.b16 %v357
    %v429 = vunpack.c.l.b16 %v358
    %v430 = vunpack.c.h.b16 %v358
    %v431 = vunpack.c.l.b16 %v359
    %v432 = vunpack.c.h.b16 %v359
    %v433 = vunpack.c.l.b16 %v360
    %v434 = vunpack.c.h.b16 %v360
    %v435 = vunpack.c.l.b16 %v361
    %v436 = vunpack.c.h.b16 %v361
    %v437 = vunpack.c.l.b16 %v362
    %v438 = vunpack.c.h.b16 %v362
    %v439 = vunpack.c.l.b16 %v363
    %v440 = vunpack.c.h.b16 %v363
    %v441 = vunpack.c.l.b16 %v364
    %v442 = vunpack.c.h.b16 %v364
    %v443 = vunpack.c.l.b16 %v365
    %v444 = vunpack.c.h.b16 %v365
    %v445 = vunpack.c.l.b16 %v366
    %v446 = vunpack.c.h.b16 %v366
    %v447 = vunpack.c.l.b16 %v367
    %v448 = vunpack.c.h.b16 %v367
    %v449 = vunpack.c.l.b16 %v368
    %v450 = vunpack.c.h.b16 %v368
    %v451 = vunpack.c.l.b16 %v369
    %v452 = vunpack.c.h.b16 %v369
    %v453 = vunpack.c.l.b16 %v370
    %v454 = vunpack.c.h.b16 %v370
    %v455 = vunpack.c.l.b16 %v371
    %v456 = vunpack.c.h.b16 %v371
    %v457 = vunpack.c.l.b16 %v372
    %v458 = vunpack.c.h.b16 %v372
    %v459 = vunpack.c.l.b16 %v373
    %v460 = vunpack.c.h.b16 %v373
    %v461 = vunpack.c.l.b16 %v374
    %v462 = vunpack.c.h.b16 %v374
    %v463 = vunpack.c.l.b16 %v375
    %v464 = vunpack.c.h.b16 %v375
    %v465 = vunpack.c.l.b16 %v376
    %v466 = vunpack.c.h.b16 %v376
    %v467 = vunpack.c.l.b16 %v377
    %v468 = vunpack.c.h.b16 %v377
    %v469 = vunpack.c.l.b16 %v378
    %v470 = vunpack.c.h.b16 %v378
    %v471 = vunpack.c.l.b16 %v379
    %v472 = vunpack.c.h.b16 %v379
    %v473 = vunpack.c.l.b16 %v380
    %v474 = vunpack.c.h.b16 %v380
    %v475 = vunpack.c.l.b16 %v381
    %v476 = vunpack.c.h.b16 %v381
    %v477 = vunpack.c.l.b16 %v382
    %v478 = vunpack.c.h.b16 %v382
    %v479 = vunpack.c.l.b16 %v383
    %v480 = vunpack.c.h.b16 %v383
    %v481 = vunpack.c.l.b16 %v384
    %v482 = vunpack.c.h.b16 %v384
    %v483 = vunpack.c.l.b16 %v385
    %v484 = vunpack.c.h.b16 %v385
    %v485 = vunpack.c.l.b16 %v386
    %v486 = vunpack.c.h.b16 %v386
    %v487 = vunpack.c.l.b16 %v387
    %v488 = vunpack.c.h.b16 %v387
    %v489 = vunpack.c.l.b16 %v388
    %v490 = vunpack.c.h.b16 %v388
    %v491 = vpack.c.b16 %v429, %v427
    %v492 = vpack.c.b16 %v430, %v428
    %v493 = vpack.c.b16 %v433, %v431
    %v494 = vpack.c.b16 %v434, %v432
    %v495 = vpack.c.b16 %v437, %v435
    %v496 = vpack.c.b16 %v438, %v436
    %v497 = vpack.c.b16 %v441, %v439
    %v498 = vpack.c.b16 %v442, %v440
    %v499 = vpack.c.b16 %v445, %v443
    %v500 = vpack.c.b16 %v446, %v444
    %v501 = vpack.c.b16 %v449, %v447
    %v502 = vpack.c.b16 %v450, %v448
    %v503 = vpack.c.b16 %v453, %v451
    %v504 = vpack.c.b16 %v454, %v452
    %v505 = vpack.c.b16 %v457, %v455
    %v506 = vpack.c.b16 %v458, %v456
    %v507 = vpack.c.b16 %v461, %v459
    %v508 = vpack.c.b16 %v462, %v460
    %v509 = vpack.c.b16 %v465, %v463
    %v510 = vpack.c.b16 %v466, %v464
    %v511 = vpack.c.b16 %v469, %v467
    %v512 = vpack.c.b16 %v470, %v468
    %v513 = vpack.c.b16 %v473, %v471
    %v514 = vpack.c.b16 %v474, %v472
    %v515 = vpack.c.b16 %v477, %v475
    %v516 = vpack.c.b16 %v478, %v476
    %v517 = vpack.c.b16 %v481, %v479
    %v518 = vpack.c.b16 %v482, %v480
    %v519 = vpack.c.b16 %v485, %v483
    %v520 = vpack.c.b16 %v486, %v484
    %v521 = vpack.c.b16 %v489, %v487
    %v522 = vpack.c.b16 %v490, %v488
    %555 = vmatpush.bf16.msra.mxu0 %v505
    %556 = vmatpush.bf16.msra.mxu0 %v503
    %557 = vmatpush.bf16.msra.mxu0 %v501
    %558 = vmatpush.bf16.msra.mxu0 %v499
    %559 = vmatpush.bf16.msra.mxu0 %v497
    %560 = vmatpush.bf16.msra.mxu0 %v495
    %561 = vmatpush.bf16.msra.mxu0 %v493
    %562 = vmatpush.bf16.msra.mxu0 %v491
    %563 = vmatmul.bf16.gmra.mxu0 %v354
    %v564 = vpop.f32.mrf.mxu0
    %v565 = vadd.f32 %v393, %v564
    %v566 = vpop.f32.mrf.mxu0
    %v567 = vadd.f32 %v393, %v566
    %568 = vdwg.mxu0
    %569 = vmatpush.bf16.msra.mxu0 %v521
    %570 = vmatpush.bf16.msra.mxu0 %v519
    %571 = vmatpush.bf16.msra.mxu0 %v517
    %572 = vmatpush.bf16.msra.mxu0 %v515
    %573 = vmatpush.bf16.msra.mxu0 %v513
    %574 = vmatpush.bf16.msra.mxu0 %v511
    %575 = vmatpush.bf16.msra.mxu0 %v509
    %576 = vmatpush.bf16.msra.mxu0 %v507
    %577 = vmatmul.bf16.gmra.mxu0 %v355
    %v578 = vpop.f32.mrf.mxu0
    %v579 = vadd.f32 %v565, %v578
    %v580 = vpop.f32.mrf.mxu0
    %v581 = vadd.f32 %v567, %v580
    %582 = vdwg.mxu0
    %583 = vmatpush.bf16.msra.mxu0 %v506
    %584 = vmatpush.bf16.msra.mxu0 %v504
    %585 = vmatpush.bf16.msra.mxu0 %v502
    %586 = vmatpush.bf16.msra.mxu0 %v500
    %587 = vmatpush.bf16.msra.mxu0 %v498
    %588 = vmatpush.bf16.msra.mxu0 %v496
    %589 = vmatpush.bf16.msra.mxu0 %v494
    %590 = vmatpush.bf16.msra.mxu0 %v492
    %591 = vmatmul.bf16.gmra.mxu0 %v354
    %v592 = vpop.f32.mrf.mxu0
    %v593 = vadd.f32 %v394, %v592
    %v594 = vpop.f32.mrf.mxu0
    %v595 = vadd.f32 %v394, %v594
    %596 = vdwg.mxu0
    %597 = vmatpush.bf16.msra.mxu0 %v522
    %598 = vmatpush.bf16.msra.mxu0 %v520
    %599 = vmatpush.bf16.msra.mxu0 %v518
    %600 = vmatpush.bf16.msra.mxu0 %v516
    %601 = vmatpush.bf16.msra.mxu0 %v514
    %602 = vmatpush.bf16.msra.mxu0 %v512
    %603 = vmatpush.bf16.msra.mxu0 %v510
    %604 = vmatpush.bf16.msra.mxu0 %v508
    %605 = vmatmul.bf16.gmra.mxu0 %v355
    %v606 = vpop.f32.mrf.mxu0
    %v607 = vadd.f32 %v593, %v606
    %v608 = vpop.f32.mrf.mxu0
    %v609 = vadd.f32 %v595, %v608
    %610 = vdwg.mxu0
    %v611 = vmax.f32 %v579, 0.0
    %v612 = vmax.f32 %v607, 0.0
    %v613 = vmax.f32 %v581, 0.0
    %v614 = vmax.f32 %v609, 0.0
    %v615 = vpack.c.bf16 %v613, %v611
    %v616 = vpack.c.bf16 %v614, %v612
    %v617 = vld [vmem:[#allocation8] sm:$0xf]
    %v618 = vld [vmem:[#allocation8 + $0x4] sm:$0xf]
    %v619 = vld [vmem:[#allocation8 + $0x8] sm:$0xf]
    %v620 = vld [vmem:[#allocation8 + $0xc] sm:$0xf]
    %v621 = vld [vmem:[#allocation8 + $0x10] sm:$0xf]
    %v622 = vld [vmem:[#allocation8 + $0x14] sm:$0xf]
    %v623 = vld [vmem:[#allocation8 + $0x18] sm:$0xf]
    %v624 = vld [vmem:[#allocation8 + $0x1c] sm:$0xf]
    %v625 = vld [vmem:[#allocation8 + $0x20] sm:$0xf]
    %v626 = vld [vmem:[#allocation8 + $0x24] sm:$0xf]
    %v627 = vld [vmem:[#allocation8 + $0x28] sm:$0xf]
    %v628 = vld [vmem:[#allocation8 + $0x2c] sm:$0xf]
    %v629 = vld [vmem:[#allocation8 + $0x30] sm:$0xf]
    %v630 = vld [vmem:[#allocation8 + $0x34] sm:$0xf]
    %v631 = vld [vmem:[#allocation8 + $0x38] sm:$0xf]
    %v632 = vld [vmem:[#allocation8 + $0x3c] sm:$0xf]
    %v633 = vld [vmem:[#allocation8 + $0x40] sm:$0xf]
    %v634 = vld [vmem:[#allocation8 + $0x44] sm:$0xf]
    %v635 = vld [vmem:[#allocation8 + $0x48] sm:$0xf]
    %v636 = vld [vmem:[#allocation8 + $0x4c] sm:$0xf]
    %v637 = vld [vmem:[#allocation8 + $0x50] sm:$0xf]
    %v638 = vld [vmem:[#allocation8 + $0x54] sm:$0xf]
    %v639 = vld [vmem:[#allocation8 + $0x58] sm:$0xf]
    %v640 = vld [vmem:[#allocation8 + $0x5c] sm:$0xf]
    %v641 = vld [vmem:[#allocation8 + $0x60] sm:$0xf]
    %v642 = vld [vmem:[#allocation8 + $0x64] sm:$0xf]
    %v643 = vld [vmem:[#allocation8 + $0x68] sm:$0xf]
    %v644 = vld [vmem:[#allocation8 + $0x6c] sm:$0xf]
    %v645 = vld [vmem:[#allocation8 + $0x70] sm:$0xf]
    %v646 = vld [vmem:[#allocation8 + $0x74] sm:$0xf]
    %v647 = vld [vmem:[#allocation8 + $0x78] sm:$0xf]
    %v648 = vld [vmem:[#allocation8 + $0x7c] sm:$0xf]
    %v649 = vld [vmem:[%s4] sm:$0x1]
    %v651 = vperm.slane %v649, 0
    %v685 = vunpack.c.l.b16 %v617
    %v686 = vunpack.c.l.b16 %v618
    %v687 = vunpack.c.l.b16 %v619
    %v688 = vunpack.c.l.b16 %v620
    %v689 = vunpack.c.l.b16 %v621
    %v690 = vunpack.c.l.b16 %v622
    %v691 = vunpack.c.l.b16 %v623
    %v692 = vunpack.c.l.b16 %v624
    %v693 = vunpack.c.l.b16 %v625
    %v694 = vunpack.c.l.b16 %v626
    %v695 = vunpack.c.l.b16 %v627
    %v696 = vunpack.c.l.b16 %v628
    %v697 = vunpack.c.l.b16 %v629
    %v698 = vunpack.c.l.b16 %v630
    %v699 = vunpack.c.l.b16 %v631
    %v700 = vunpack.c.l.b16 %v632
    %v701 = vunpack.c.l.b16 %v633
    %v702 = vunpack.c.l.b16 %v634
    %v703 = vunpack.c.l.b16 %v635
    %v704 = vunpack.c.l.b16 %v636
    %v705 = vunpack.c.l.b16 %v637
    %v706 = vunpack.c.l.b16 %v638
    %v707 = vunpack.c.l.b16 %v639
    %v708 = vunpack.c.l.b16 %v640
    %v709 = vunpack.c.l.b16 %v641
    %v710 = vunpack.c.l.b16 %v642
    %v711 = vunpack.c.l.b16 %v643
    %v712 = vunpack.c.l.b16 %v644
    %v713 = vunpack.c.l.b16 %v645
    %v714 = vunpack.c.l.b16 %v646
    %v715 = vunpack.c.l.b16 %v647
    %v716 = vunpack.c.l.b16 %v648
    %v717 = vpack.c.b16 %v686, %v685
    %v718 = vpack.c.b16 %v688, %v687
    %v719 = vpack.c.b16 %v690, %v689
    %v720 = vpack.c.b16 %v692, %v691
    %v721 = vpack.c.b16 %v694, %v693
    %v722 = vpack.c.b16 %v696, %v695
    %v723 = vpack.c.b16 %v698, %v697
    %v724 = vpack.c.b16 %v700, %v699
    %v725 = vpack.c.b16 %v702, %v701
    %v726 = vpack.c.b16 %v704, %v703
    %v727 = vpack.c.b16 %v706, %v705
    %v728 = vpack.c.b16 %v708, %v707
    %v729 = vpack.c.b16 %v710, %v709
    %v730 = vpack.c.b16 %v712, %v711
    %v731 = vpack.c.b16 %v714, %v713
    %v732 = vpack.c.b16 %v716, %v715
    %749 = vmatpush.bf16.msra.mxu0 %v724
    %750 = vmatpush.bf16.msra.mxu0 %v723
    %751 = vmatpush.bf16.msra.mxu0 %v722
    %752 = vmatpush.bf16.msra.mxu0 %v721
    %753 = vmatpush.bf16.msra.mxu0 %v720
    %754 = vmatpush.bf16.msra.mxu0 %v719
    %755 = vmatpush.bf16.msra.mxu0 %v718
    %756 = vmatpush.bf16.msra.mxu0 %v717
    %757 = vmatmul.bf16.gmra.mxu0 %v615
    %v758 = vpop.f32.mrf.mxu0
    %v759 = vadd.f32 %v651, %v758
    %v760 = vpop.f32.mrf.mxu0
    %v761 = vadd.f32 %v651, %v760
    %762 = vdwg.mxu0
    %763 = vmatpush.bf16.msra.mxu0 %v732
    %764 = vmatpush.bf16.msra.mxu0 %v731
    %765 = vmatpush.bf16.msra.mxu0 %v730
    %766 = vmatpush.bf16.msra.mxu0 %v729
    %767 = vmatpush.bf16.msra.mxu0 %v728
    %768 = vmatpush.bf16.msra.mxu0 %v727
    %769 = vmatpush.bf16.msra.mxu0 %v726
    %770 = vmatpush.bf16.msra.mxu0 %v725
    %771 = vmatmul.bf16.gmra.mxu0 %v616
    %v772 = vpop.f32.mrf.mxu0
    %v773 = vadd.f32 %v759, %v772
    %v774 = vpop.f32.mrf.mxu0
    %v775 = vadd.f32 %v761, %v774
    %776 = vdwg.mxu0
    %777 = vst [vmem:[#allocation10] sm:$0xff] %v773
    %778 = vst [vmem:[#allocation10 + $0x8] sm:$0xff] %v775
    // Predicated region
    $region38: #{tpu_custom_call.1} parent=1 // pred_check
      _
    $region39: #{tpu_custom_call.1} parent=1 // pred_check_branch
      %780 = sbr.rel (0) target = $region41
    $region40: #{tpu_custom_call.1} parent=1 // pred_region
      %782 = vsyncadd [#allocation4], 0
      %s783 = sshll.u32 [#allocation10], 4
      %s784 = int_to_ptr.vmem [resolvable:$true] %s783
      %s785 = sshll.u32 %s5, 4
      %s786 = int_to_ptr.hbm [resolvable:$true] %s785
      %791 = dma.vmem_to_hbm [thread:$0]  %s784, 256, %s786, [#allocation4], 128, 128, 8
    $region41: #{tpu_custom_call.1} parent=1 // pred_fallthru
      _
    // Predicated region
    $region42: #{tpu_custom_call.1} parent=1 // pred_check
      _
    $region43: #{tpu_custom_call.1} parent=1 // pred_check_branch
      %793 = sbr.rel (0) target = $region45
    $region44: #{tpu_custom_call.1} parent=1 // pred_region
      %795 = dma.done [#allocation4], 256
    $region45: #{tpu_custom_call.1} parent=1 // pred_fallthru
      _
    %796 = vsyncpa [#allocation3], 1
    %797 = vsyncpa [#allocation6], 1
    %798 = vsyncpa [#allocation9], 1
    %799 = vsyncpa [#allocation4], 1

</llo_original>
